<compile_context>
chip_gen: v5e
topology: v5e:2x2
jax: 0.10.0
libtpu: 0.0.40
codegen_flags: <defaults>
</compile_context>

<pallas_src>
import math

import jax
import jax.numpy as jnp
from jax.experimental import pallas as pl
from jax.experimental.pallas import tpu as pltpu


def _round_up(x, m):
    return ((x + m - 1) // m) * m


# ----------------------------- kernels --------------------------------------


def _linear_leakyrelu_kernel_f32(x_ref, w_ref, b_ref, o_ref):
    """f32 output: accumulate directly into the VMEM-resident output block."""
    k = pl.program_id(2)
    partial = jnp.dot(x_ref[...], w_ref[...], preferred_element_type=jnp.float32)

    @pl.when(k == 0)
    def _():
        o_ref[...] = partial            # direct write: no zero-init pass

    @pl.when(k > 0)
    def _():
        o_ref[...] += partial

    @pl.when(k == pl.num_programs(2) - 1)
    def _():
        y = o_ref[...] + b_ref[...]                    # bias already f32
        o_ref[...] = jnp.maximum(y, jnp.float32(0.01) * y)   # LeakyReLU(0.01)


def _linear_leakyrelu_kernel_acc(x_ref, w_ref, b_ref, o_ref, acc_ref):
    """Non-f32 output: f32 accumulator scratch, cast only in the epilogue."""
    k = pl.program_id(2)
    partial = jnp.dot(x_ref[...], w_ref[...], preferred_element_type=jnp.float32)

    @pl.when(k == 0)
    def _():
        acc_ref[...] = partial

    @pl.when(k > 0)
    def _():
        acc_ref[...] += partial

    @pl.when(k == pl.num_programs(2) - 1)
    def _():
        y = acc_ref[...] + b_ref[...]
        y = jnp.maximum(y, jnp.float32(0.01) * y)
        o_ref[...] = y.astype(o_ref.dtype)


# --------------------------- tile selection ----------------------------------


def _pick_tm(M, tm_max):
    """Pick the M tile: whole (8-aligned) M if it fits under tm_max, otherwise
    the largest halving of tm_max that keeps M-padding waste <= ~12.5%."""
    m8 = _round_up(max(M, 1), 8)
    if m8 <= tm_max:
        return m8
    cands = []
    c = tm_max
    while c >= 8:
        cands.append(c)
        if c == 8:
            break
        c = max(8, (c // 2) // 8 * 8)
    allowance = m8 + max(m8 // 8, 8)
    for c in cands:                       # descending: prefer the biggest tile
        if _round_up(M, c) <= allowance:
            return c
    return min(cands, key=lambda t: (_round_up(M, t), -t))


# ------------------------------ wrapper ---------------------------------------


def linear_pack_forward(x, weight, bias, *, tm=512, tn=512, tk=1024,
                        mxu_dtype="auto"):
    """Forward pass of LinearPack: leaky_relu(x @ weight + bias, 0.01).

    x:      [..., in_dim]
    weight: [in_dim, out_dim]   (transposed vs. PyTorch's [out_dim, in_dim])
    bias:   [out_dim]
    mxu_dtype: "auto" (default) casts f32 operands to bf16 for the MXU
               (f32 accumulation is kept); pass None to keep operand dtype,
               or an explicit dtype.
    returns [..., out_dim] with the dtype of x.
    """
    in_dim, out_dim = weight.shape
    lead_shape = x.shape[:-1]
    M = math.prod(lead_shape) if lead_shape else 1
    out_dtype = x.dtype
    x2d = x.reshape(M, in_dim)

    # MXU operand dtype (bf16 by default for f32 inputs).
    if mxu_dtype == "auto":
        op_dtype = jnp.bfloat16 if x.dtype == jnp.float32 else None
    else:
        op_dtype = mxu_dtype

    # Re-align user tile sizes to the (8,128) constraint, clamp to problem size.
    tm_a = max(8, _round_up(tm, 8))
    tn_a = max(128, _round_up(tn, 128))
    tk_a = max(128, _round_up(tk, 128))
    TM = _pick_tm(M, tm_a)
    TN = min(tn_a, _round_up(out_dim, 128))
    TK = min(tk_a, _round_up(in_dim, 128))

    Mp = _round_up(M, TM)
    Np = _round_up(out_dim, TN)
    Kp = _round_up(in_dim, TK)

    # v7x has 2 TensorCores: make sure at least one "parallel" axis has >=2
    # blocks so the grid can be sharded (no-op cost on v5e/v6e).
    if Mp // TM == 1 and Np // TN == 1:
        if TN >= 256:
            TN = max(128, (TN // 2) // 128 * 128)
            Np = _round_up(out_dim, TN)
        elif TM >= 16:
            TM = max(8, (TM // 2) // 8 * 8)
            Mp = _round_up(M, TM)

    # Cast operands before padding (halves the pad copy too).
    if op_dtype is not None and x2d.dtype != op_dtype:
        x2d = x2d.astype(op_dtype)
    w = weight
    if op_dtype is not None and w.dtype != op_dtype:
        w = w.astype(op_dtype)

    # Zero-pad only when actually needed (zero K padding keeps reduction exact,
    # lane-dense Np keeps output stores unmasked).
    if (Mp, Kp) != (M, in_dim):
        x2d = jnp.pad(x2d, ((0, Mp - M), (0, Kp - in_dim)))
    if (Kp, Np) != (in_dim, out_dim):
        w = jnp.pad(w, ((0, Kp - in_dim), (0, Np - out_dim)))
    b = bias.astype(jnp.float32)
    if Np != out_dim:
        b = jnp.pad(b, (0, Np - out_dim))
    b = b.reshape(1, Np)

    grid = (Mp // TM, Np // TN, Kp // TK)

    out_is_f32 = jnp.dtype(out_dtype) == jnp.dtype(jnp.float32)
    if out_is_f32:
        kernel = _linear_leakyrelu_kernel_f32
        scratch_shapes = []
        acc_bytes = 0
    else:
        kernel = _linear_leakyrelu_kernel_acc
        scratch_shapes = [pltpu.VMEM((TM, TN), jnp.float32)]
        acc_bytes = TM * TN * 4

    x_item = jnp.dtype(x2d.dtype).itemsize
    w_item = jnp.dtype(w.dtype).itemsize
    o_item = jnp.dtype(out_dtype).itemsize

    # VMEM footprint (double-buffered inputs/outputs + accumulator) -> limit.
    vmem_est = (2 * TM * TK * x_item + 2 * TK * TN * w_item
                + 2 * TM * TN * o_item + acc_bytes + 2 * TN * 4)
    vmem_limit = min(128 * 1024 * 1024, max(32 * 1024 * 1024, 2 * vmem_est))

    cost = pl.CostEstimate(
        flops=int(2 * Mp * Kp * Np + 2 * Mp * Np),
        transcendentals=0,
        bytes_accessed=int(Mp * Kp * x_item * (Np // TN)
                           + Kp * Np * w_item * (Mp // TM)
                           + Mp * Np * o_item + Np * 4),
    )

    out = pl.pallas_call(
        kernel,
        out_shape=jax.ShapeDtypeStruct((Mp, Np), out_dtype),
        grid_spec=pltpu.PrefetchScalarGridSpec(
            num_scalar_prefetch=0,
            grid=grid,
            in_specs=[
                pl.BlockSpec((TM, TK), lambda i, j, k: (i, k)),
                pl.BlockSpec((TK, TN), lambda i, j, k: (k, j)),
                pl.BlockSpec((1, TN), lambda i, j, k: (0, j)),
            ],
            out_specs=pl.BlockSpec((TM, TN), lambda i, j, k: (i, j)),
            scratch_shapes=scratch_shapes,
        ),
        compiler_params=pltpu.CompilerParams(
            dimension_semantics=("parallel", "parallel", "arbitrary"),
            vmem_limit_bytes=int(vmem_limit),
        ),
        cost_estimate=cost,
    )(x2d, w, b)

    if (Mp, Np) != (M, out_dim):
        out = out[:M, :out_dim]
    return out.reshape(*lead_shape, out_dim)


def init_linear_pack_params(key, in_dim, out_dim, dtype=jnp.float32):
    """Deterministic init mirroring nn.Linear defaults (uniform +-1/sqrt(in_dim))."""
    kw, kb = jax.random.split(key)
    bound = 1.0 / math.sqrt(in_dim)
    # stored as [in_dim, out_dim] (transpose of PyTorch layout)
    weight = jax.random.uniform(kw, (in_dim, out_dim), dtype, -bound, bound)
    bias = jax.random.uniform(kb, (out_dim,), dtype, -bound, bound)
    return weight, bias


if __name__ == "__main__":
    key = jax.random.PRNGKey(0)
    k_x, k_p = jax.random.split(key)

    batch, seq, in_dim, out_dim = 2, 8, 32, 32
    x = jax.random.normal(k_x, (batch, seq, in_dim), dtype=jnp.float32)
    weight, bias = init_linear_pack_params(k_p, in_dim, out_dim)

    y = linear_pack_forward(x, weight, bias)
    y = jax.block_until_ready(y)

    # Pure-JAX reference check, consistent with the bf16-operand / f32-acc path.
    xb = x.astype(jnp.bfloat16).astype(jnp.float32)
    wb = weight.astype(jnp.bfloat16).astype(jnp.float32)
    ref = xb @ wb + bias.astype(jnp.float32)
    ref = jnp.where(ref >= 0, ref, 0.01 * ref)

    assert y.shape == (batch, seq, out_dim)
    assert jnp.allclose(y.astype(jnp.float32), ref, atol=1e-4, rtol=1e-4)

    print("KERNEL_OK")
</pallas_src>

<mosaic_0001>
module attributes {stable_mosaic.version = 11 : i64} {
  func.func @_linear_leakyrelu_kernel_f32(%arg0: i32, %arg1: i32, %arg2: i32, %arg3: memref<8x128xbf16, #tpu.memory_space<vmem>>, %arg4: memref<128x128xbf16, #tpu.memory_space<vmem>>, %arg5: memref<1x128xf32, #tpu.memory_space<vmem>>, %arg6: memref<8x128xf32, #tpu.memory_space<vmem>>) attributes {dimension_semantics = [#tpu.dimension_semantics<parallel>, #tpu.dimension_semantics<parallel>, #tpu.dimension_semantics<arbitrary>], iteration_bounds = array<i64: 2, 1, 1>, scalar_prefetch = 0 : i64, scratch_operands = 0 : i64, tpu.core_type = #tpu.core_type<tc>, window_params = [{transform_indices = @transform_0, window_bounds = array<i64: 8, 128>}, {transform_indices = @transform_1, window_bounds = array<i64: 128, 128>}, {transform_indices = @transform_2, window_bounds = array<i64: 1, 128>}, {transform_indices = @transform_3, window_bounds = array<i64: 8, 128>}]} {
    %c0 = arith.constant 0 : index
    %c0_0 = arith.constant 0 : index
    %0 = vector.load %arg3[%c0, %c0_0] : memref<8x128xbf16, #tpu.memory_space<vmem>>, vector<8x128xbf16>
    %c0_1 = arith.constant 0 : index
    %c0_2 = arith.constant 0 : index
    %1 = vector.load %arg4[%c0_1, %c0_2] : memref<128x128xbf16, #tpu.memory_space<vmem>>, vector<128x128xbf16>
    %cst = arith.constant dense<0.000000e+00> : vector<8x128xf32>
    %2 = tpu.matmul %0, %1, %cst {dimension_numbers = #tpu.dot_dimension_numbers<[1], [0], [0], [1], [0, 0, 1, 1], [], []>} : vector<8x128xbf16>, vector<128x128xbf16>, vector<8x128xf32> -> vector<8x128xf32>
    %c0_i32 = arith.constant 0 : i32
    %3 = arith.cmpi eq, %arg2, %c0_i32 : i32
    %4 = arith.extui %3 : i1 to i32
    %c0_i32_3 = arith.constant 0 : i32
    %5 = arith.cmpi ne, %4, %c0_i32_3 : i32
    scf.if %5 {
      %c0_8 = arith.constant 0 : index
      %c0_9 = arith.constant 0 : index
      %12 = vector.load %arg6[%c0_8, %c0_9] : memref<8x128xf32, #tpu.memory_space<vmem>>, vector<8x128xf32>
      tpu.vector_store %arg6[%c0_8, %c0_9], %2 {strides = array<i32>} : memref<8x128xf32, #tpu.memory_space<vmem>>, vector<8x128xf32>,
    } else {
    }
    %c0_i32_4 = arith.constant 0 : i32
    %6 = arith.cmpi sgt, %arg2, %c0_i32_4 : i32
    %7 = arith.extui %6 : i1 to i32
    %c0_i32_5 = arith.constant 0 : i32
    %8 = arith.cmpi ne, %7, %c0_i32_5 : i32
    scf.if %8 {
      %c0_8 = arith.constant 0 : index
      %c0_9 = arith.constant 0 : index
      %12 = vector.load %arg6[%c0_8, %c0_9] : memref<8x128xf32, #tpu.memory_space<vmem>>, vector<8x128xf32>
      %13 = arith.addf %12, %2 : vector<8x128xf32>
      %c0_10 = arith.constant 0 : index
      %c0_11 = arith.constant 0 : index
      %14 = vector.load %arg6[%c0_10, %c0_11] : memref<8x128xf32, #tpu.memory_space<vmem>>, vector<8x128xf32>
      tpu.vector_store %arg6[%c0_10, %c0_11], %13 {strides = array<i32>} : memref<8x128xf32, #tpu.memory_space<vmem>>, vector<8x128xf32>,
    } else {
    }
    %c0_i32_6 = arith.constant 0 : i32
    %9 = arith.cmpi eq, %arg2, %c0_i32_6 : i32
    %10 = arith.extui %9 : i1 to i32
    %c0_i32_7 = arith.constant 0 : i32
    %11 = arith.cmpi ne, %10, %c0_i32_7 : i32
    scf.if %11 {
      %c0_8 = arith.constant 0 : index
      %c0_9 = arith.constant 0 : index
      %12 = vector.load %arg6[%c0_8, %c0_9] : memref<8x128xf32, #tpu.memory_space<vmem>>, vector<8x128xf32>
      %c0_10 = arith.constant 0 : index
      %c0_11 = arith.constant 0 : index
      %13 = vector.load %arg5[%c0_10, %c0_11] : memref<1x128xf32, #tpu.memory_space<vmem>>, vector<1x128xf32>
      %14 = vector.broadcast %13 : vector<1x128xf32> to vector<8x128xf32>
      %15 = arith.addf %12, %14 : vector<8x128xf32>
      %cst_12 = arith.constant 0.00999999977 : f32
      %16 = vector.broadcast %cst_12 : f32 to vector<8x128xf32>
      %17 = arith.mulf %16, %15 : vector<8x128xf32>
      %18 = arith.maximumf %15, %17 : vector<8x128xf32>
      %c0_13 = arith.constant 0 : index
      %c0_14 = arith.constant 0 : index
      %19 = vector.load %arg6[%c0_13, %c0_14] : memref<8x128xf32, #tpu.memory_space<vmem>>, vector<8x128xf32>
      tpu.vector_store %arg6[%c0_13, %c0_14], %18 {strides = array<i32>} : memref<8x128xf32, #tpu.memory_space<vmem>>, vector<8x128xf32>,
    } else {
    }
    return
  }
  func.func @transform_0(%arg0: i32, %arg1: i32, %arg2: i32) -> (i32, i32) {
    %c0_i32 = arith.constant 0 : i32
    return %arg0, %arg2 : i32, i32
  }
  func.func @transform_1(%arg0: i32, %arg1: i32, %arg2: i32) -> (i32, i32) {
    %c0_i32 = arith.constant 0 : i32
    return %arg2, %arg1 : i32, i32
  }
  func.func @transform_2(%arg0: i32, %arg1: i32, %arg2: i32) -> (i32, i32) {
    %c0_i32 = arith.constant 0 : i32
    %c0_i32_0 = arith.constant 0 : i32
    return %c0_i32, %arg1 : i32, i32
  }
  func.func @transform_3(%arg0: i32, %arg1: i32, %arg2: i32) -> (i32, i32) {
    %c0_i32 = arith.constant 0 : i32
    return %arg0, %arg1 : i32, i32
  }
}

</mosaic_0001>

<llo_original>
// kernel: tpu_custom_call.1
$region0: #{tpu_custom_call.1}
  #allocation0 [shape = 'u32[]', space=smem, size = 0x4, offset = 0x4, fixed_abs, tag = 'smem constant byte address 0x4 - core index']
  #allocation1 [shape = 'u32[72,128]{1,0:T(1,128)}', space=vmem, size = 0x9000, scoped, tag = 'internal scratch']
  %s0 = inlined_call_operand.hbm [shape: bf16[16,128], index: 0, kind: input, shape index: {}]
  %s1 = inlined_call_operand.hbm [shape: bf16[128,128], index: 1, kind: input, shape index: {}]
  %s2 = inlined_call_operand.vmem [shape: f32[1,128], index: 2, kind: input, shape index: {}]
  %s3 = inlined_call_operand.hbm [shape: f32[16,128], index: 3, kind: output, shape index: {}]
  %s4 = sld [smem:[#allocation0]]
  $region65: #{tpu_custom_call.1} parent=0
    _
  %s6 = ssub.s32 1, %s4
  %s7 = scalar_select 0, %s6, %s4
  $region1: #{tpu_custom_call.1} parent=0
    #allocation2 [shape = 'u8[4096]{0}', space=vmem, size = 0x1000, scoped, tag = 'input window, operand 0']
    #allocation3 [shape = 's32[2]{0}', space=sflag, size = 0x8, scoped, tag = 'scoped memory for tpu_custom_call.1']
    #allocation4 [shape = 's32[2]{0}', space=sflag, size = 0x8, scoped, tag = 'scoped memory for tpu_custom_call.1']
    #allocation5 [shape = 'u8[32768]{0}', space=vmem, size = 0x8000, scoped, tag = 'input window, operand 1, single buffered']
    #allocation6 [shape = 's32[1]{0}', space=sflag, size = 0x4, scoped, tag = 'scoped memory for tpu_custom_call.1']
    #allocation7 [shape = 'u8[8192]{0}', space=vmem, size = 0x2000, scoped, tag = 'output window, operand 0']
    %8 = vsyncpa [#allocation3], 0
    %s9 = scalar_lea.sflag [#allocation3], 1
    %10 = vsyncpa %s9, 0
    %11 = vsyncpa [#allocation6], 0
    %12 = vsyncpa [#allocation4], 0
    %s13 = scalar_lea.sflag [#allocation4], 1
    %14 = vsyncpa %s13, 0
    loop: start=0, step=1, limit=4
    $region2: #{tpu_custom_call.1} parent=1 // loop_pre_header
      _
    $region3: #{tpu_custom_call.1} parent=1 // loop_header
      %s16 = sphi 0, %s20
      %p17 = scmp.ge.s32.totalorder %s16, 4
      %s23 = sphi 0, %s42
      %s24 = sphi 0, %s38
      %s25 = sphi 0, %s34
      %s26 = sphi 0, %s23
      %s27 = sphi 0, %s24
      %s28 = sphi 0, %s25
      %s29 = sphi 0, %s26
      %s30 = sphi 0, %s27
      %s31 = sphi 0, %s28
      %s47 = sphi 0, %s49
      %s50 = sphi 0, %s47
      %s51 = sphi 0, %s50
      %s67 = sphi 0, %s51
      %s75 = sphi 0, %s77
      %s78 = sphi 0, %s75
      %s79 = sphi 0, %s78
      %s95 = sphi 0, %s79
      %s101 = sphi 0, %s103
      %s104 = sphi 0, %s101
      %s105 = sphi 0, %s104
      %s121 = sphi 0, %s105
      %s129 = sphi 0, %s131
      %s132 = sphi 0, %s129
      %s133 = sphi 0, %s132
      %s149 = sphi 0, %s133
    $region4: #{tpu_custom_call.1} parent=1 // loop_header_branch
      %19 = sbr.rel (%p17) target = $region8
    $region5: #{tpu_custom_call.1} parent=1 // loop_body
      %s21 = ssub.s32 %s16, 1
      %s22 = ssub.s32 %s16, 2
      %s32 = sadd.s32 1, %s25
      %p33 = scmp.ge.s32.totalorder %s32, 1
      %s34 = scalar_select %p33, 0, %s32
      %s35 = sadd.s32 1, %s24
      %s36 = scalar_select %p33, %s35, %s24
      %p37 = scmp.ge.s32.totalorder %s36, 1
      %s38 = scalar_select %p37, 0, %s36
      %s39 = sadd.s32 1, %s23
      %s40 = scalar_select %p37, %s39, %s23
      %p41 = scmp.ge.s32.totalorder %s40, 2
      %s42 = scalar_select %p41, 0, %s40
      %s43 = ssub.s32 %s23, %s42
      %s44 = ssub.s32 %s25, %s34
      %s45 = sor.u32 %s43, %s44
      %p46 = scmp.eq.s32.totalorder %s45, 0
      %s48 = sadd.s32 %s47, 1
      %s49 = scalar_select %p46, %s47, %s48
      %p52 = pneg %p46
      %p53 = scmp.eq.s32.totalorder %s16, 1
      %p54 = por %p52, %p53
      %p55 = scmp.ne.s32.totalorder %s47, %s50
      %p56 = scmp.eq.s32.totalorder %s16, 0
      %p57 = por %p55, %p56
      %p58 = scmp.ne.s32.totalorder %s47, %s50
      %p59 = scmp.eq.s32.totalorder %s21, 1
      %p60 = por %p58, %p59
      %p61 = scmp.ne.s32.totalorder %s50, %s51
      %p62 = scmp.eq.s32.totalorder %s21, 0
      %p63 = por %p61, %p62
      %p64 = scmp.ne.s32.totalorder %s50, %s51
      %p65 = scmp.eq.s32.totalorder %s22, 1
      %p66 = por %p64, %p65
      %p68 = scmp.ne.s32.totalorder %s51, %s67
      %p69 = scmp.eq.s32.totalorder %s22, 0
      %p70 = por %p68, %p69
      %s71 = ssub.s32 %s25, %s34
      %s72 = ssub.s32 %s24, %s38
      %s73 = sor.u32 %s71, %s72
      %p74 = scmp.eq.s32.totalorder %s73, 0
      %s76 = sadd.s32 %s75, 1
      %s77 = scalar_select %p74, %s75, %s76
      %p80 = pneg %p74
      %p81 = scmp.eq.s32.totalorder %s16, 1
      %p82 = por %p80, %p81
      %p83 = scmp.ne.s32.totalorder %s75, %s78
      %p84 = scmp.eq.s32.totalorder %s16, 0
      %p85 = por %p83, %p84
      %p86 = scmp.ne.s32.totalorder %s75, %s78
      %p87 = scmp.eq.s32.totalorder %s21, 1
      %p88 = por %p86, %p87
      %p89 = scmp.ne.s32.totalorder %s78, %s79
      %p90 = scmp.eq.s32.totalorder %s21, 0
      %p91 = por %p89, %p90
      %p92 = scmp.ne.s32.totalorder %s78, %s79
      %p93 = scmp.eq.s32.totalorder %s22, 1
      %p94 = por %p92, %p93
      %p96 = scmp.ne.s32.totalorder %s79, %s95
      %p97 = scmp.eq.s32.totalorder %s22, 0
      %p98 = por %p96, %p97
      %s99 = ssub.s32 %s24, %s38
      %p100 = scmp.eq.s32.totalorder %s99, 0
      %s102 = sadd.s32 %s101, 1
      %s103 = scalar_select %p100, %s101, %s102
      %p106 = pneg %p100
      %p107 = scmp.eq.s32.totalorder %s16, 1
      %p108 = por %p106, %p107
      %p109 = scmp.ne.s32.totalorder %s101, %s104
      %p110 = scmp.eq.s32.totalorder %s16, 0
      %p111 = por %p109, %p110
      %p112 = scmp.ne.s32.totalorder %s101, %s104
      %p113 = scmp.eq.s32.totalorder %s21, 1
      %p114 = por %p112, %p113
      %p115 = scmp.ne.s32.totalorder %s104, %s105
      %p116 = scmp.eq.s32.totalorder %s21, 0
      %p117 = por %p115, %p116
      %p118 = scmp.ne.s32.totalorder %s104, %s105
      %p119 = scmp.eq.s32.totalorder %s22, 1
      %p120 = por %p118, %p119
      %p122 = scmp.ne.s32.totalorder %s105, %s121
      %p123 = scmp.eq.s32.totalorder %s22, 0
      %p124 = por %p122, %p123
      %s125 = ssub.s32 %s23, %s42
      %s126 = ssub.s32 %s24, %s38
      %s127 = sor.u32 %s125, %s126
      %p128 = scmp.eq.s32.totalorder %s127, 0
      %s130 = sadd.s32 %s129, 1
      %s131 = scalar_select %p128, %s129, %s130
      %p134 = pneg %p128
      %p135 = scmp.eq.s32.totalorder %s16, 1
      %p136 = por %p134, %p135
      %p137 = scmp.ne.s32.totalorder %s129, %s132
      %p138 = scmp.eq.s32.totalorder %s16, 0
      %p139 = por %p137, %p138
      %p140 = scmp.ne.s32.totalorder %s129, %s132
      %p141 = scmp.eq.s32.totalorder %s21, 1
      %p142 = por %p140, %p141
      %p143 = scmp.ne.s32.totalorder %s132, %s133
      %p144 = scmp.eq.s32.totalorder %s21, 0
      %p145 = por %p143, %p144
      %p146 = scmp.ne.s32.totalorder %s132, %s133
      %p147 = scmp.eq.s32.totalorder %s22, 1
      %p148 = por %p146, %p147
      %p150 = scmp.ne.s32.totalorder %s133, %s149
      %p151 = scmp.eq.s32.totalorder %s22, 0
      %p152 = por %p150, %p151
      %p153 = scmp.le.s32.totalorder 1, %s16
      %p154 = scmp.lt.s32.totalorder %s16, 3
      %p155 = pnand %p153, %p154
      %p156 = pneg %p155
      // Predicated region
      $region9: #{tpu_custom_call.1} parent=5 // pred_check
        _
      $region10: #{tpu_custom_call.1} parent=5 // pred_check_branch
        %158 = sbr.rel (%p155) target = $region12
      $region11: #{tpu_custom_call.1} parent=5 // pred_region
        %s159 = ssub.s32 %s16, 1
        // Predicated region
        $region13: #{tpu_custom_call.1} parent=11 // pred_check
          %p160 = pneg %p91
        $region14: #{tpu_custom_call.1} parent=11 // pred_check_branch
          %162 = sbr.rel (%p160) target = $region16
        $region15: #{tpu_custom_call.1} parent=11 // pred_region
          %s163 = smul.u32 16, %s28
          %165 = vsyncadd [#allocation6], 0
          %s166 = sadd.s32 %s27, %s163
          %s167 = smul.addr %s166, 4
          %s168 = scalar_lea.hbm %s1, %s167
          %s169 = sshll.u32 %s168, 4
          %s170 = int_to_ptr.hbm [resolvable:$true] %s169
          %s171 = sshll.u32 [#allocation5], 4
          %s172 = int_to_ptr.vmem [resolvable:$true] %s171
          %177 = dma.hbm_to_vmem [thread:$0]  %s170, 1024, %s172, [#allocation6], 64, 64, 4
        $region16: #{tpu_custom_call.1} parent=11 // pred_fallthru
          _
        // Predicated region
        $region17: #{tpu_custom_call.1} parent=11 // pred_check
          %p178 = pneg %p117
        $region18: #{tpu_custom_call.1} parent=11 // pred_check_branch
          %180 = sbr.rel (%p178) target = $region20
        $region19: #{tpu_custom_call.1} parent=11 // pred_region
          %p181 = scmp.lt.s32.totalorder %s27, 0
          %s182 = scalar_select %p181, %s27, 0
          %s183 = scalar_lea.vmem %s2, %s182
        $region20: #{tpu_custom_call.1} parent=11 // pred_fallthru
          _
      $region12: #{tpu_custom_call.1} parent=5 // pred_fallthru
        _
      %p184 = scmp.lt.s32.totalorder %s16, 2
      // Predicated region
      $region21: #{tpu_custom_call.1} parent=5 // pred_check
        %p185 = pneg %p184
      $region22: #{tpu_custom_call.1} parent=5 // pred_check_branch
        %187 = sbr.rel (%p185) target = $region24
      $region23: #{tpu_custom_call.1} parent=5 // pred_region
        // Predicated region
        $region25: #{tpu_custom_call.1} parent=23 // pred_check
          %p188 = pneg %p57
        $region26: #{tpu_custom_call.1} parent=23 // pred_check_branch
          %190 = sbr.rel (%p188) target = $region28
        $region27: #{tpu_custom_call.1} parent=23 // pred_region
          %s191 = sand.u32 %s47, 1
          %s192 = scalar_lea.sflag [#allocation3], %s191
          %s193 = sand.u32 %s47, 1
          %s194 = smul.addr %s193, 4
          %s195 = scalar_lea.vmem [#allocation2], %s194
          %197 = vsyncadd %s192, 0
          %s198 = sadd.s32 %s25, %s23
          %s199 = smul.addr %s198, 4
          %s200 = scalar_lea.hbm %s0, %s199
          %s202 = sshll.u32 %s200, 4
          %s203 = int_to_ptr.hbm [resolvable:$true] %s202
          %s204 = sshll.u32 %s195, 4
          %s205 = int_to_ptr.vmem [resolvable:$true] %s204
          %207 = dma.hbm_to_vmem [thread:$0]  %s203, 64, %s205, %s192
        $region28: #{tpu_custom_call.1} parent=23 // pred_fallthru
          _
      $region24: #{tpu_custom_call.1} parent=5 // pred_fallthru
        _
      %p208 = scmp.le.s32.totalorder 1, %s16
      %p209 = scmp.lt.s32.totalorder %s16, 3
      %p210 = pnand %p208, %p209
      %p211 = pneg %p210
      // Predicated region
      $region29: #{tpu_custom_call.1} parent=5 // pred_check
        _
      $region30: #{tpu_custom_call.1} parent=5 // pred_check_branch
        %213 = sbr.rel (%p210) target = $region32
      $region31: #{tpu_custom_call.1} parent=5 // pred_region
        %s214 = ssub.s32 %s16, 1
        %s215 = sand.u32 %s50, 1
        %s216 = scalar_lea.sflag [#allocation3], %s215
        %s217 = sand.u32 %s50, 1
        %s218 = smul.addr %s217, 4
        %s219 = scalar_lea.vmem [#allocation2], %s218
        // Predicated region
        $region33: #{tpu_custom_call.1} parent=31 // pred_check
          %p220 = pneg %p63
        $region34: #{tpu_custom_call.1} parent=31 // pred_check_branch
          %222 = sbr.rel (%p220) target = $region36
        $region35: #{tpu_custom_call.1} parent=31 // pred_region
          %224 = dma.done %s216, 64
        $region36: #{tpu_custom_call.1} parent=31 // pred_fallthru
          _
        // Predicated region
        $region37: #{tpu_custom_call.1} parent=31 // pred_check
          %p225 = pneg %p91
        $region38: #{tpu_custom_call.1} parent=31 // pred_check_branch
          %227 = sbr.rel (%p225) target = $region40
        $region39: #{tpu_custom_call.1} parent=31 // pred_region
          %229 = dma.done [#allocation6], 1024
        $region40: #{tpu_custom_call.1} parent=31 // pred_fallthru
          _
        %s230 = sand.u32 %s50, 1
        %s231 = scalar_lea.sflag [#allocation3], %s230
        %s232 = sand.u32 %s50, 1
        %s233 = smul.addr %s232, 4
        %s234 = scalar_lea.vmem [#allocation2], %s233
        %p235 = pneg %p63
        %p236 = pneg %p60
        %p237 = pneg %p91
        %p238 = pneg %p88
        %p239 = scmp.lt.s32.totalorder %s27, 0
        %s240 = scalar_select %p239, %s27, 0
        %s241 = scalar_lea.vmem %s2, %s240
        %p242 = pneg %p117
        %p243 = pneg %p114
        %p244 = pneg %p145
        %p245 = pneg %p142
        %s246 = sand.u32 %s132, 1
        %s247 = scalar_lea.sflag [#allocation4], %s246
        %s248 = sand.u32 %s132, 1
        %s249 = smul.addr %s248, 8
        %s250 = scalar_lea.vmem [#allocation7], %s249
        %s251 = smul.u32 16, %s28
        %p252 = scmp.lt.s32.totalorder %s27, 0
        %s253 = scalar_select %p252, %s27, 0
        %s254 = scalar_lea.vmem %s2, %s253
        %v255 = vld [vmem:[%s219] sm:$0xf]
        %v256 = vld [vmem:[#allocation5] sm:$0xf]
        %v257 = vld [vmem:[#allocation5 + $0x4] sm:$0xf]
        %v258 = vld [vmem:[#allocation5 + $0x8] sm:$0xf]
        %v259 = vld [vmem:[#allocation5 + $0xc] sm:$0xf]
        %v260 = vld [vmem:[#allocation5 + $0x10] sm:$0xf]
        %v261 = vld [vmem:[#allocation5 + $0x14] sm:$0xf]
        %v262 = vld [vmem:[#allocation5 + $0x18] sm:$0xf]
        %v263 = vld [vmem:[#allocation5 + $0x1c] sm:$0xf]
        %v264 = vld [vmem:[#allocation5 + $0x20] sm:$0xf]
        %v265 = vld [vmem:[#allocation5 + $0x24] sm:$0xf]
        %v266 = vld [vmem:[#allocation5 + $0x28] sm:$0xf]
        %v267 = vld [vmem:[#allocation5 + $0x2c] sm:$0xf]
        %v268 = vld [vmem:[#allocation5 + $0x30] sm:$0xf]
        %v269 = vld [vmem:[#allocation5 + $0x34] sm:$0xf]
        %v270 = vld [vmem:[#allocation5 + $0x38] sm:$0xf]
        %v271 = vld [vmem:[#allocation5 + $0x3c] sm:$0xf]
        %v288 = vunpack.c.l.b16 %v256
        %v289 = vunpack.c.l.b16 %v257
        %v290 = vunpack.c.l.b16 %v258
        %v291 = vunpack.c.l.b16 %v259
        %v292 = vunpack.c.l.b16 %v260
        %v293 = vunpack.c.l.b16 %v261
        %v294 = vunpack.c.l.b16 %v262
        %v295 = vunpack.c.l.b16 %v263
        %v296 = vunpack.c.l.b16 %v264
        %v297 = vunpack.c.l.b16 %v265
        %v298 = vunpack.c.l.b16 %v266
        %v299 = vunpack.c.l.b16 %v267
        %v300 = vunpack.c.l.b16 %v268
        %v301 = vunpack.c.l.b16 %v269
        %v302 = vunpack.c.l.b16 %v270
        %v303 = vunpack.c.l.b16 %v271
        %v304 = vpack.c.b16 %v289, %v288
        %v305 = vpack.c.b16 %v291, %v290
        %v306 = vpack.c.b16 %v293, %v292
        %v307 = vpack.c.b16 %v295, %v294
        %v308 = vpack.c.b16 %v297, %v296
        %v309 = vpack.c.b16 %v299, %v298
        %v310 = vpack.c.b16 %v301, %v300
        %v311 = vpack.c.b16 %v303, %v302
        %320 = vmatpush.bf16.msra.mxu0 %v311
        %321 = vmatpush.bf16.msra.mxu0 %v310
        %322 = vmatpush.bf16.msra.mxu0 %v309
        %323 = vmatpush.bf16.msra.mxu0 %v308
        %324 = vmatpush.bf16.msra.mxu0 %v307
        %325 = vmatpush.bf16.msra.mxu0 %v306
        %326 = vmatpush.bf16.msra.mxu0 %v305
        %327 = vmatpush.bf16.msra.mxu0 %v304
        %328 = vmatmul.bf16.gmra.mxu0 %v255
        %v329 = vpop.f32.mrf.mxu0
        %v330 = vadd.f32 0.0, %v329
        %v331 = vpop.f32.mrf.mxu0
        %332 = vdwg.mxu0
        %p333 = scmp.eq.s32.totalorder %s28, 0
        // Predicated region
        $region41: #{tpu_custom_call.1} parent=31 // pred_check
          %p334 = pneg %p333
        $region42: #{tpu_custom_call.1} parent=31 // pred_check_branch
          %336 = sbr.rel (%p334) target = $region44
        $region43: #{tpu_custom_call.1} parent=31 // pred_region
          %337 = vst [vmem:[%s250] sm:$0xff] %v330
        $region44: #{tpu_custom_call.1} parent=31 // pred_fallthru
          _
        %p338 = scmp.gt.s32.totalorder %s28, 0
        // Predicated region
        $region45: #{tpu_custom_call.1} parent=31 // pred_check
          %p339 = pneg %p338
        $region46: #{tpu_custom_call.1} parent=31 // pred_check_branch
          %341 = sbr.rel (%p339) target = $region48
        $region47: #{tpu_custom_call.1} parent=31 // pred_region
          %v342 = vld [vmem:[%s250] sm:$0xff]
          %v343 = vadd.f32 %v342, %v330
          %344 = vst [vmem:[%s250] sm:$0xff] %v343
        $region48: #{tpu_custom_call.1} parent=31 // pred_fallthru
          _
        // Predicated region
        $region49: #{tpu_custom_call.1} parent=31 // pred_check
          %p345 = pneg %p333
        $region50: #{tpu_custom_call.1} parent=31 // pred_check_branch
          %347 = sbr.rel (%p345) target = $region52
        $region51: #{tpu_custom_call.1} parent=31 // pred_region
          %v348 = vld [vmem:[%s250] sm:$0xff]
          %v349 = vld [vmem:[%s254] sm:$0x1]
          %v351 = vperm.slane %v349, 0
          %v353 = vadd.f32 %v348, %v351
          %v354 = vmul.f32 %v353, 0.01
          %v355 = vmax.f32 %v353, %v354
          %356 = vst [vmem:[%s250] sm:$0xff] %v355
        $region52: #{tpu_custom_call.1} parent=31 // pred_fallthru
          _
        %s357 = sand.u32 %s132, 1
        %s358 = scalar_lea.sflag [#allocation4], %s357
        %s359 = sand.u32 %s132, 1
        %s360 = smul.addr %s359, 8
        %s361 = scalar_lea.vmem [#allocation7], %s360
        // Predicated region
        $region53: #{tpu_custom_call.1} parent=31 // pred_check
          %p362 = pneg %p142
        $region54: #{tpu_custom_call.1} parent=31 // pred_check_branch
          %364 = sbr.rel (%p362) target = $region56
        $region55: #{tpu_custom_call.1} parent=31 // pred_region
          %366 = vsyncadd %s358, 0
          %s367 = sadd.s32 %s27, %s26
          %s368 = smul.addr %s367, 8
          %s369 = scalar_lea.hbm %s3, %s368
          %s371 = sshll.u32 %s361, 4
          %s372 = int_to_ptr.vmem [resolvable:$true] %s371
          %s373 = sshll.u32 %s369, 4
          %s374 = int_to_ptr.hbm [resolvable:$true] %s373
          %376 = dma.vmem_to_hbm [thread:$0]  %s372, 128, %s374, %s358
        $region56: #{tpu_custom_call.1} parent=31 // pred_fallthru
          _
      $region32: #{tpu_custom_call.1} parent=5 // pred_fallthru
        _
      %p377 = scmp.le.s32.totalorder 2, %s16
      // Predicated region
      $region57: #{tpu_custom_call.1} parent=5 // pred_check
        %p378 = pneg %p377
      $region58: #{tpu_custom_call.1} parent=5 // pred_check_branch
        %380 = sbr.rel (%p378) target = $region60
      $region59: #{tpu_custom_call.1} parent=5 // pred_region
        %s381 = ssub.s32 %s16, 2
        // Predicated region
        $region61: #{tpu_custom_call.1} parent=59 // pred_check
          %p382 = pneg %p148
        $region62: #{tpu_custom_call.1} parent=59 // pred_check_branch
          %384 = sbr.rel (%p382) target = $region64
        $region63: #{tpu_custom_call.1} parent=59 // pred_region
          %s385 = sand.u32 %s133, 1
          %s386 = scalar_lea.sflag [#allocation4], %s385
          %s387 = sand.u32 %s133, 1
          %s388 = smul.addr %s387, 8
          %s389 = scalar_lea.vmem [#allocation7], %s388
          %391 = dma.done %s386, 128
        $region64: #{tpu_custom_call.1} parent=59 // pred_fallthru
          _
      $region60: #{tpu_custom_call.1} parent=5 // pred_fallthru
        _
    $region6: #{tpu_custom_call.1} parent=1 // loop_footer
      %s20 = sadd.s32 1, %s16
    $region7: #{tpu_custom_call.1} parent=1 // loop_footer_branch
      %15 = sbr.rel target = $region3
    $region8: #{tpu_custom_call.1} parent=1 // loop_exit
      _
    %392 = vsyncpa [#allocation3], 1
    %s393 = scalar_lea.sflag [#allocation3], 1
    %394 = vsyncpa %s393, 1
    %395 = vsyncpa [#allocation6], 1
    %396 = vsyncpa [#allocation4], 1
    %s397 = scalar_lea.sflag [#allocation4], 1
    %398 = vsyncpa %s397, 1

</llo_original>
